<compile_context>
chip_gen: v7x
topology: tpu7x:2x2x1
jax: 0.10.0
libtpu: 0.0.40
codegen_flags: <defaults>
</compile_context>

<pallas_src>
import jax
import jax.numpy as jnp
from jax.experimental import pallas as pl
from jax.experimental.pallas import tpu as pltpu


def _round_up(x, m):
    return (x + m - 1) // m * m


def discriminator_kernel(x_ref, w1_ref, b1_ref, w2_ref, b2_ref, w3_ref, b3_ref, o_ref):
    # fc1: (TB, D_in) @ (D_in, 64) on the MXU, f32 accumulation.
    h1 = jnp.dot(x_ref[...], w1_ref[...], preferred_element_type=jnp.float32) + b1_ref[...]
    h1 = jnp.maximum(h1, 0.0)

    # fc2: (TB, 64) @ (64, 16) on the MXU, f32 accumulation.
    h2 = jnp.dot(h1, w2_ref[...], preferred_element_type=jnp.float32) + b2_ref[...]
    h2 = jnp.maximum(h2, 0.0)

    # fc3 (out_features=1): VPU multiply + lane reduction instead of an N=1 MXU
    # pass; w3 is stored as (1, 16) so it broadcasts over the (TB, 16) tile.
    logit = jnp.sum(h2 * w3_ref[...], axis=-1, keepdims=True) + b3_ref[...]

    # Sigmoid goes to the EUP (its own bundle slot).
    o_ref[...] = jax.nn.sigmoid(logit).astype(o_ref.dtype)


def discriminator_forward(x, params, *, block_b=1024, stream_bf16=False):
    """x: (B, image_size*image_size). Returns (B, 1) float32.

    block_b: batch tile size. 1024 rows already sits near the HBM roofline on
    v5e/v6e/v7x while keeping the double-buffered x stream well under the 64 MiB
    v7x VMEM; raise to 2048-4096 on v5e/v6e for slightly fewer grid steps.
    """
    w1, b1, w2, b2, w3, b3 = params
    B, D_in = x.shape

    if stream_bf16:
        # x dominates bytes_accessed; halving it ~doubles throughput. bf16 is
        # MXU-native on all generations; accumulation stays f32.
        x = x.astype(jnp.bfloat16)
        w1 = w1.astype(jnp.bfloat16)

    # Batch tile: multiple of 8 (sublane granularity), clamped for tiny batches.
    TB = min(block_b, _round_up(B, 8))
    grid = (pl.cdiv(B, TB),)  # edge tile is clipped by Pallas on write

    # Advisory cost estimate so XLA schedules this call sensibly in larger graphs.
    param_bytes = sum(int(p.size) * p.dtype.itemsize for p in (w1, b1, w2, b2, w3, b3))
    cost = pl.CostEstimate(
        flops=2 * B * D_in * 64 + 2 * B * 64 * 16 + 2 * B * 16,
        transcendentals=B,  # sigmoid
        bytes_accessed=int(x.size) * x.dtype.itemsize + param_bytes + B * 4,
    )

    # Keep 2-deep buffering of the x tile alive without overshooting v7x's
    # 64 MiB physical VMEM (default scoped limits: 16 MiB v5e / 32 MiB v6e,v7x).
    tile_bytes = TB * D_in * x.dtype.itemsize
    vmem_limit = int(min(96 * 2**20, max(32 * 2**20, 3 * tile_bytes + 4 * 2**20)))

    return pl.pallas_call(
        discriminator_kernel,
        out_shape=jax.ShapeDtypeStruct((B, 1), jnp.float32),
        grid=grid,
        in_specs=[
            pl.BlockSpec((TB, D_in), lambda i: (i, 0)),   # streamed, double-buffered
            pl.BlockSpec(w1.shape, lambda i: (0, 0)),     # resident weights/biases
            pl.BlockSpec(b1.shape, lambda i: (0, 0)),
            pl.BlockSpec(w2.shape, lambda i: (0, 0)),
            pl.BlockSpec(b2.shape, lambda i: (0, 0)),
            pl.BlockSpec(w3.shape, lambda i: (0, 0)),
            pl.BlockSpec(b3.shape, lambda i: (0, 0)),
        ],
        out_specs=pl.BlockSpec((TB, 1), lambda i: (i, 0)),
        compiler_params=pltpu.CompilerParams(
            dimension_semantics=("parallel",),  # shard batch tiles across TCs (v7x)
            vmem_limit_bytes=vmem_limit,
        ),
        cost_estimate=cost,
    )(x, w1, b1, w2, b2, w3, b3)


def init_params(key, image_size):
    """Parameter init mirroring nn.Linear's uniform(-1/sqrt(fan_in), ...).

    w1, w2 are stored pre-transposed as (in, out) so the kernel computes
    x @ W + b (== PyTorch's x @ W_pt.T + b_pt). w3 keeps PyTorch's native
    (out=1, in=16) layout so the last layer is a broadcast-multiply + reduce.
    Biases are (1, out) for clean 2-D broadcasting in VMEM.
    """
    d_in = image_size * image_size
    params = []
    for fan_in, fan_out, w_shape in [
        (d_in, 64, (d_in, 64)),
        (64, 16, (64, 16)),
        (16, 1, (1, 16)),     # PyTorch (out, in) layout for the last layer
    ]:
        key, kw, kb = jax.random.split(key, 3)
        bound = 1.0 / jnp.sqrt(fan_in)
        w = jax.random.uniform(kw, w_shape, jnp.float32, -bound, bound)
        b = jax.random.uniform(kb, (1, fan_out), jnp.float32, -bound, bound)
        params += [w, b]
    return tuple(params)


def reference_forward(x, params):
    w1, b1, w2, b2, w3, b3 = params
    h1 = jnp.maximum(x @ w1 + b1, 0.0)
    h2 = jnp.maximum(h1 @ w2 + b2, 0.0)
    return jax.nn.sigmoid(h2 @ w3.T + b3)


if __name__ == "__main__":
    image_size = 8          # input dim = 64
    batch = 2

    key = jax.random.PRNGKey(0)
    key, kx = jax.random.split(key)
    x = jax.random.normal(kx, (batch, image_size * image_size), jnp.float32)
    params = init_params(key, image_size)

    out = discriminator_forward(x, params)
    out = jax.block_until_ready(out)
    ref = reference_forward(x, params)
    assert out.shape == (batch, 1)
    assert jnp.allclose(out, ref, atol=1e-5, rtol=1e-5)

    # Also exercise the batch grid with a non-tile-aligned batch (edge-tile clip).
    key, kx2 = jax.random.split(key)
    x2 = jax.random.normal(kx2, (10, image_size * image_size), jnp.float32)
    out2 = jax.block_until_ready(discriminator_forward(x2, params, block_b=8))
    ref2 = reference_forward(x2, params)
    assert out2.shape == (10, 1)
    assert jnp.allclose(out2, ref2, atol=1e-5, rtol=1e-5)

    print("KERNEL_OK")
</pallas_src>

<mosaic_0001>
module attributes {stable_mosaic.version = 11 : i64} {
  func.func @discriminator_kernel(%arg0: i32, %arg1: memref<8x64xf32, #tpu.memory_space<vmem>>, %arg2: memref<64x64xf32, #tpu.memory_space<vmem>>, %arg3: memref<1x64xf32, #tpu.memory_space<vmem>>, %arg4: memref<64x16xf32, #tpu.memory_space<vmem>>, %arg5: memref<1x16xf32, #tpu.memory_space<vmem>>, %arg6: memref<1x16xf32, #tpu.memory_space<vmem>>, %arg7: memref<1x1xf32, #tpu.memory_space<vmem>>, %arg8: memref<8x1xf32, #tpu.memory_space<vmem>>) attributes {dimension_semantics = [#tpu.dimension_semantics<parallel>], iteration_bounds = array<i64: 1>, scalar_prefetch = 0 : i64, scratch_operands = 0 : i64, tpu.core_type = #tpu.core_type<tc>, window_params = [{transform_indices = @transform_0, window_bounds = array<i64: 8, 64>}, {pipeline_mode = #tpu.pipeline_mode<synchronous>, transform_indices = @transform_1, window_bounds = array<i64: 64, 64>}, {pipeline_mode = #tpu.pipeline_mode<synchronous>, transform_indices = @transform_2, window_bounds = array<i64: 1, 64>}, {pipeline_mode = #tpu.pipeline_mode<synchronous>, transform_indices = @transform_3, window_bounds = array<i64: 64, 16>}, {pipeline_mode = #tpu.pipeline_mode<synchronous>, transform_indices = @transform_4, window_bounds = array<i64: 1, 16>}, {pipeline_mode = #tpu.pipeline_mode<synchronous>, transform_indices = @transform_5, window_bounds = array<i64: 1, 16>}, {pipeline_mode = #tpu.pipeline_mode<synchronous>, transform_indices = @transform_6, window_bounds = array<i64: 1, 1>}, {transform_indices = @transform_7, window_bounds = array<i64: 8, 1>}]} {
    %c0 = arith.constant 0 : index
    %c0_0 = arith.constant 0 : index
    %0 = vector.load %arg1[%c0, %c0_0] : memref<8x64xf32, #tpu.memory_space<vmem>>, vector<8x64xf32>
    %c0_1 = arith.constant 0 : index
    %c0_2 = arith.constant 0 : index
    %1 = vector.load %arg2[%c0_1, %c0_2] : memref<64x64xf32, #tpu.memory_space<vmem>>, vector<64x64xf32>
    %cst = arith.constant dense<0.000000e+00> : vector<8x64xf32>
    %2 = tpu.matmul %0, %1, %cst {dimension_numbers = #tpu.dot_dimension_numbers<[1], [0], [0], [1], [0, 0, 1, 1], [], []>} : vector<8x64xf32>, vector<64x64xf32>, vector<8x64xf32> -> vector<8x64xf32>
    %c0_3 = arith.constant 0 : index
    %c0_4 = arith.constant 0 : index
    %3 = vector.load %arg3[%c0_3, %c0_4] : memref<1x64xf32, #tpu.memory_space<vmem>>, vector<1x64xf32>
    %4 = vector.broadcast %3 : vector<1x64xf32> to vector<8x64xf32>
    %5 = arith.addf %2, %4 : vector<8x64xf32>
    %cst_5 = arith.constant 0.000000e+00 : f32
    %6 = vector.broadcast %cst_5 : f32 to vector<8x64xf32>
    %7 = arith.maximumf %5, %6 : vector<8x64xf32>
    %c0_6 = arith.constant 0 : index
    %c0_7 = arith.constant 0 : index
    %8 = vector.load %arg4[%c0_6, %c0_7] : memref<64x16xf32, #tpu.memory_space<vmem>>, vector<64x16xf32>
    %cst_8 = arith.constant dense<0.000000e+00> : vector<8x16xf32>
    %9 = tpu.matmul %7, %8, %cst_8 {dimension_numbers = #tpu.dot_dimension_numbers<[1], [0], [0], [1], [0, 0, 1, 1], [], []>} : vector<8x64xf32>, vector<64x16xf32>, vector<8x16xf32> -> vector<8x16xf32>
    %c0_9 = arith.constant 0 : index
    %c0_10 = arith.constant 0 : index
    %10 = vector.load %arg5[%c0_9, %c0_10] : memref<1x16xf32, #tpu.memory_space<vmem>>, vector<1x16xf32>
    %11 = vector.broadcast %10 : vector<1x16xf32> to vector<8x16xf32>
    %12 = arith.addf %9, %11 : vector<8x16xf32>
    %cst_11 = arith.constant 0.000000e+00 : f32
    %13 = vector.broadcast %cst_11 : f32 to vector<8x16xf32>
    %14 = arith.maximumf %12, %13 : vector<8x16xf32>
    %c0_12 = arith.constant 0 : index
    %c0_13 = arith.constant 0 : index
    %15 = vector.load %arg6[%c0_12, %c0_13] : memref<1x16xf32, #tpu.memory_space<vmem>>, vector<1x16xf32>
    %16 = vector.broadcast %15 : vector<1x16xf32> to vector<8x16xf32>
    %17 = arith.mulf %14, %16 : vector<8x16xf32>
    %cst_14 = arith.constant dense<0.000000e+00> : vector<8xf32>
    %18 = vector.multi_reduction <add>, %17, %cst_14 [1] : vector<8x16xf32> to vector<8xf32>
    %19 = vector.shape_cast %18 : vector<8xf32> to vector<8x1xf32>
    %c0_15 = arith.constant 0 : index
    %c0_16 = arith.constant 0 : index
    %20 = vector.load %arg7[%c0_15, %c0_16] : memref<1x1xf32, #tpu.memory_space<vmem>>, vector<1x1xf32>
    %21 = vector.broadcast %20 : vector<1x1xf32> to vector<8x1xf32>
    %22 = arith.addf %19, %21 : vector<8x1xf32>
    %23 = arith.negf %22 : vector<8x1xf32>
    %24 = math.exp %23 : vector<8x1xf32>
    %cst_17 = arith.constant 1.000000e+00 : f32
    %25 = vector.broadcast %cst_17 : f32 to vector<8x1xf32>
    %26 = arith.addf %25, %24 : vector<8x1xf32>
    %27 = arith.divf %25, %26 : vector<8x1xf32>
    %c0_18 = arith.constant 0 : index
    %c0_19 = arith.constant 0 : index
    %28 = vector.load %arg8[%c0_18, %c0_19] : memref<8x1xf32, #tpu.memory_space<vmem>>, vector<8x1xf32>
    tpu.vector_store %arg8[%c0_18, %c0_19], %27 {strides = array<i32>} : memref<8x1xf32, #tpu.memory_space<vmem>>, vector<8x1xf32>,
    return
  }
  func.func @transform_0(%arg0: i32) -> (i32, i32) {
    %c0_i32 = arith.constant 0 : i32
    %c0_i32_0 = arith.constant 0 : i32
    return %arg0, %c0_i32 : i32, i32
  }
  func.func @transform_1(%arg0: i32) -> (i32, i32) {
    %c0_i32 = arith.constant 0 : i32
    %c0_i32_0 = arith.constant 0 : i32
    %c0_i32_1 = arith.constant 0 : i32
    return %c0_i32, %c0_i32_0 : i32, i32
  }
  func.func @transform_2(%arg0: i32) -> (i32, i32) {
    %c0_i32 = arith.constant 0 : i32
    %c0_i32_0 = arith.constant 0 : i32
    %c0_i32_1 = arith.constant 0 : i32
    return %c0_i32, %c0_i32_0 : i32, i32
  }
  func.func @transform_3(%arg0: i32) -> (i32, i32) {
    %c0_i32 = arith.constant 0 : i32
    %c0_i32_0 = arith.constant 0 : i32
    %c0_i32_1 = arith.constant 0 : i32
    return %c0_i32, %c0_i32_0 : i32, i32
  }
  func.func @transform_4(%arg0: i32) -> (i32, i32) {
    %c0_i32 = arith.constant 0 : i32
    %c0_i32_0 = arith.constant 0 : i32
    %c0_i32_1 = arith.constant 0 : i32
    return %c0_i32, %c0_i32_0 : i32, i32
  }
  func.func @transform_5(%arg0: i32) -> (i32, i32) {
    %c0_i32 = arith.constant 0 : i32
    %c0_i32_0 = arith.constant 0 : i32
    %c0_i32_1 = arith.constant 0 : i32
    return %c0_i32, %c0_i32_0 : i32, i32
  }
  func.func @transform_6(%arg0: i32) -> (i32, i32) {
    %c0_i32 = arith.constant 0 : i32
    %c0_i32_0 = arith.constant 0 : i32
    %c0_i32_1 = arith.constant 0 : i32
    return %c0_i32, %c0_i32_0 : i32, i32
  }
  func.func @transform_7(%arg0: i32) -> (i32, i32) {
    %c0_i32 = arith.constant 0 : i32
    %c0_i32_0 = arith.constant 0 : i32
    return %arg0, %c0_i32 : i32, i32
  }
}

</mosaic_0001>

<llo_original>
// kernel: tpu_custom_call.1
$region0: #{tpu_custom_call.1}
  #allocation0 [shape = 'u32[]', space=smem, size = 0x4, offset = 0x4, fixed_abs, tag = 'smem constant byte address 0x4 - core index']
  #allocation1 [shape = 'u32[144,128]{1,0:T(1,128)}', space=vmem, size = 0x12000, scoped, tag = 'internal scratch']
  #allocation2 [shape = 'f32[1,1]{1,0:T(1,128)S(1)}', space=vmem, size = 0x200, scoped, tag = 'scoped memory for tpu_custom_call.1']
  %s0 = inlined_call_operand.vmem [shape: f32[2,64], index: 0, kind: input, shape index: {}]
  %s1 = inlined_call_operand.vmem [shape: f32[64,64], index: 1, kind: input, shape index: {}]
  %s2 = inlined_call_operand.vmem [shape: f32[1,64], index: 2, kind: input, shape index: {}]
  %s3 = inlined_call_operand.vmem [shape: f32[64,16], index: 3, kind: input, shape index: {}]
  %s4 = inlined_call_operand.vmem [shape: f32[1,16], index: 4, kind: input, shape index: {}]
  %s5 = inlined_call_operand.vmem [shape: f32[1,16], index: 5, kind: input, shape index: {}]
  %s6 = inlined_call_operand.<no memory space> [shape: f32[1,1], index: 6, kind: input, shape index: {}]
  %s7 = inlined_call_operand.vmem [shape: f32[2,1], index: 7, kind: output, shape index: {}]
  %s8 = sld [smem:[#allocation0]]
  $region68: #{tpu_custom_call.1} parent=0
    _
  %s10 = ssub.s32 1, %s8
  %s11 = scalar_select 0, %s10, %s8
  %v12 = vstv %s6
  %13 = vst [vmem:[#allocation2] sm:$0x1] %v12
  $region1: #{tpu_custom_call.1} parent=0
    #allocation3 [shape = 'u8[4096]{0}', space=vmem, size = 0x1000, scoped, tag = 'output window, operand 0, single buffered']
    // Predicated region
    $region2: #{tpu_custom_call.1} parent=1 // pred_check
      _
    $region3: #{tpu_custom_call.1} parent=1 // pred_check_branch
      %15 = sbr.rel (0) target = $region5
    $region4: #{tpu_custom_call.1} parent=1 // pred_region
      _
    $region5: #{tpu_custom_call.1} parent=1 // pred_fallthru
      _
    // Predicated region
    $region6: #{tpu_custom_call.1} parent=1 // pred_check
      _
    $region7: #{tpu_custom_call.1} parent=1 // pred_check_branch
      %17 = sbr.rel (0) target = $region9
    $region8: #{tpu_custom_call.1} parent=1 // pred_region
      _
    $region9: #{tpu_custom_call.1} parent=1 // pred_fallthru
      _
    // Predicated region
    $region10: #{tpu_custom_call.1} parent=1 // pred_check
      _
    $region11: #{tpu_custom_call.1} parent=1 // pred_check_branch
      %19 = sbr.rel (0) target = $region13
    $region12: #{tpu_custom_call.1} parent=1 // pred_region
      _
    $region13: #{tpu_custom_call.1} parent=1 // pred_fallthru
      _
    // Predicated region
    $region14: #{tpu_custom_call.1} parent=1 // pred_check
      _
    $region15: #{tpu_custom_call.1} parent=1 // pred_check_branch
      %21 = sbr.rel (0) target = $region17
    $region16: #{tpu_custom_call.1} parent=1 // pred_region
      _
    $region17: #{tpu_custom_call.1} parent=1 // pred_fallthru
      _
    // Predicated region
    $region18: #{tpu_custom_call.1} parent=1 // pred_check
      _
    $region19: #{tpu_custom_call.1} parent=1 // pred_check_branch
      %23 = sbr.rel (0) target = $region21
    $region20: #{tpu_custom_call.1} parent=1 // pred_region
      _
    $region21: #{tpu_custom_call.1} parent=1 // pred_fallthru
      _
    // Predicated region
    $region22: #{tpu_custom_call.1} parent=1 // pred_check
      _
    $region23: #{tpu_custom_call.1} parent=1 // pred_check_branch
      %25 = sbr.rel (0) target = $region25
    $region24: #{tpu_custom_call.1} parent=1 // pred_region
      _
    $region25: #{tpu_custom_call.1} parent=1 // pred_fallthru
      _
    // Predicated region
    $region26: #{tpu_custom_call.1} parent=1 // pred_check
      _
    $region27: #{tpu_custom_call.1} parent=1 // pred_check_branch
      %27 = sbr.rel (0) target = $region29
    $region28: #{tpu_custom_call.1} parent=1 // pred_region
      _
    $region29: #{tpu_custom_call.1} parent=1 // pred_fallthru
      _
    %v28 = vld [vmem:[%s0] sm:$0xff]
    %v29 = vld [vmem:[%s1] sm:$0xff]
    %v30 = vld [vmem:[%s1 + $0x8] sm:$0xff]
    %v31 = vld [vmem:[%s1 + $0x10] sm:$0xff]
    %v32 = vld [vmem:[%s1 + $0x18] sm:$0xff]
    %v33 = vld [vmem:[%s1 + $0x20] sm:$0xff]
    %v34 = vld [vmem:[%s1 + $0x28] sm:$0xff]
    %v35 = vld [vmem:[%s1 + $0x30] sm:$0xff]
    %v36 = vld [vmem:[%s1 + $0x38] sm:$0xff]
    %v37 = vld [vmem:[%s2] sm:$0x1]
    %v39 = vlaneseq
    %v40 = vshrl.u32 %v39, 7
    %v41 = vsub.s32 0, %v40
    %v42 = vrot.slane %v37, %v41
    %vm44 = vcmask 523264
    %v46 = vsel %vm44, %v28, 0
    %48 = vmatprep.subr.mxu0 0.0
    %49 = vmatpush1.msra.mxu0 %v29
    %50 = vmatprep.subr.mxu0 0.0
    %51 = vmatpush1.msra.mxu0 %v30
    %52 = vmatprep.subr.mxu0 0.0
    %53 = vmatpush1.msra.mxu0 %v31
    %54 = vmatprep.subr.mxu0 0.0
    %55 = vmatpush1.msra.mxu0 %v32
    %56 = vmatprep.subr.mxu0 0.0
    %57 = vmatpush1.msra.mxu0 %v33
    %58 = vmatprep.subr.mxu0 0.0
    %59 = vmatpush1.msra.mxu0 %v34
    %60 = vmatprep.subr.mxu0 0.0
    %61 = vmatpush1.msra.mxu0 %v35
    %62 = vmatprep.subr.mxu0 0.0
    %63 = vmatpush1.msra.mxu0 %v36
    %64 = vmatprep.subr.mxu0 0.0
    %65 = vmatpush1.msra.mxu0 0.0
    %66 = vmatprep.subr.mxu0 0.0
    %67 = vmatpush1.msra.mxu0 0.0
    %68 = vmatprep.subr.mxu0 0.0
    %69 = vmatpush1.msra.mxu0 0.0
    %70 = vmatprep.subr.mxu0 0.0
    %71 = vmatpush1.msra.mxu0 0.0
    %72 = vmatprep.subr.mxu0 0.0
    %73 = vmatpush1.msra.mxu0 0.0
    %74 = vmatprep.subr.mxu0 0.0
    %75 = vmatpush1.msra.mxu0 0.0
    %76 = vmatprep.subr.mxu0 0.0
    %77 = vmatpush1.msra.mxu0 0.0
    %78 = vmatprep.subr.mxu0 0.0
    %79 = vmatpush1.msra.mxu0 0.0
    %80 = vmatprep.subr.mxu0 0.0
    %81 = vmatpush1.msra.mxu0 0.0
    %82 = vmatprep.subr.mxu0 0.0
    %83 = vmatpush1.msra.mxu0 0.0
    %84 = vmatprep.subr.mxu0 0.0
    %85 = vmatpush1.msra.mxu0 0.0
    %86 = vmatprep.subr.mxu0 0.0
    %87 = vmatpush1.msra.mxu0 0.0
    %88 = vmatprep.subr.mxu0 0.0
    %89 = vmatpush1.msra.mxu0 0.0
    %90 = vmatprep.subr.mxu0 0.0
    %91 = vmatpush1.msra.mxu0 0.0
    %92 = vmatprep.subr.mxu0 0.0
    %93 = vmatpush1.msra.mxu0 0.0
    %94 = vmatprep.subr.mxu0 0.0
    %95 = vmatpush1.msra.mxu0 0.0
    %96 = vmatprep.subr.mxu0 0.0
    %97 = vmatpush1.msra.mxu0 0.0
    %98 = vmatprep.subr.mxu0 0.0
    %99 = vmatpush1.msra.mxu0 0.0
    %100 = vmatprep.subr.mxu0 0.0
    %101 = vmatpush1.msra.mxu0 0.0
    %102 = vmatprep.subr.mxu0 0.0
    %103 = vmatpush1.msra.mxu0 0.0
    %104 = vmatprep.subr.mxu0 0.0
    %105 = vmatpush1.msra.mxu0 0.0
    %106 = vmatprep.subr.mxu0 0.0
    %107 = vmatpush1.msra.mxu0 0.0
    %108 = vmatprep.subr.mxu0 0.0
    %109 = vmatpush1.msra.mxu0 0.0
    %110 = vmatprep.subr.mxu0 0.0
    %111 = vmatpush1.msra.mxu0 0.0
    %112 = vmatprep.mubr.f32.mxu0 0.0
    %113 = vmatmul.mubr.f32.gmra.mrb[0].mxu0 %v46
    %v114 = vpop.f32.mrb[0].mxu0
    %v115 = vadd.f32 %v42, %v114
    %v116 = vpop.f32.mrb[0].mxu0
    %117 = vdwg.mxu0
    %v118 = vmax.f32 %v115, 0.0
    %v119 = vld [vmem:[%s3] sm:$0xff]
    %v120 = vld [vmem:[%s3 + $0x8] sm:$0xff]
    %v121 = vld [vmem:[%s3 + $0x10] sm:$0xff]
    %v122 = vld [vmem:[%s3 + $0x18] sm:$0xff]
    %v123 = vld [vmem:[%s3 + $0x20] sm:$0xff]
    %v124 = vld [vmem:[%s3 + $0x28] sm:$0xff]
    %v125 = vld [vmem:[%s3 + $0x30] sm:$0xff]
    %v126 = vld [vmem:[%s3 + $0x38] sm:$0xff]
    %v127 = vld [vmem:[%s4] sm:$0x1]
    %v129 = vlaneseq
    %v130 = vshrl.u32 %v129, 7
    %v131 = vsub.s32 0, %v130
    %v132 = vrot.slane %v127, %v131
    %v135 = vsel %vm44, %v118, 0
    %137 = vmatprep.subr.mxu0 0.0
    %138 = vmatpush1.msra.mxu0 %v119
    %139 = vmatprep.subr.mxu0 0.0
    %140 = vmatpush1.msra.mxu0 %v120
    %141 = vmatprep.subr.mxu0 0.0
    %142 = vmatpush1.msra.mxu0 %v121
    %143 = vmatprep.subr.mxu0 0.0
    %144 = vmatpush1.msra.mxu0 %v122
    %145 = vmatprep.subr.mxu0 0.0
    %146 = vmatpush1.msra.mxu0 %v123
    %147 = vmatprep.subr.mxu0 0.0
    %148 = vmatpush1.msra.mxu0 %v124
    %149 = vmatprep.subr.mxu0 0.0
    %150 = vmatpush1.msra.mxu0 %v125
    %151 = vmatprep.subr.mxu0 0.0
    %152 = vmatpush1.msra.mxu0 %v126
    %153 = vmatprep.subr.mxu0 0.0
    %154 = vmatpush1.msra.mxu0 0.0
    %155 = vmatprep.subr.mxu0 0.0
    %156 = vmatpush1.msra.mxu0 0.0
    %157 = vmatprep.subr.mxu0 0.0
    %158 = vmatpush1.msra.mxu0 0.0
    %159 = vmatprep.subr.mxu0 0.0
    %160 = vmatpush1.msra.mxu0 0.0
    %161 = vmatprep.subr.mxu0 0.0
    %162 = vmatpush1.msra.mxu0 0.0
    %163 = vmatprep.subr.mxu0 0.0
    %164 = vmatpush1.msra.mxu0 0.0
    %165 = vmatprep.subr.mxu0 0.0
    %166 = vmatpush1.msra.mxu0 0.0
    %167 = vmatprep.subr.mxu0 0.0
    %168 = vmatpush1.msra.mxu0 0.0
    %169 = vmatprep.subr.mxu0 0.0
    %170 = vmatpush1.msra.mxu0 0.0
    %171 = vmatprep.subr.mxu0 0.0
    %172 = vmatpush1.msra.mxu0 0.0
    %173 = vmatprep.subr.mxu0 0.0
    %174 = vmatpush1.msra.mxu0 0.0
    %175 = vmatprep.subr.mxu0 0.0
    %176 = vmatpush1.msra.mxu0 0.0
    %177 = vmatprep.subr.mxu0 0.0
    %178 = vmatpush1.msra.mxu0 0.0
    %179 = vmatprep.subr.mxu0 0.0
    %180 = vmatpush1.msra.mxu0 0.0
    %181 = vmatprep.subr.mxu0 0.0
    %182 = vmatpush1.msra.mxu0 0.0
    %183 = vmatprep.subr.mxu0 0.0
    %184 = vmatpush1.msra.mxu0 0.0
    %185 = vmatprep.subr.mxu0 0.0
    %186 = vmatpush1.msra.mxu0 0.0
    %187 = vmatprep.subr.mxu0 0.0
    %188 = vmatpush1.msra.mxu0 0.0
    %189 = vmatprep.subr.mxu0 0.0
    %190 = vmatpush1.msra.mxu0 0.0
    %191 = vmatprep.subr.mxu0 0.0
    %192 = vmatpush1.msra.mxu0 0.0
    %193 = vmatprep.subr.mxu0 0.0
    %194 = vmatpush1.msra.mxu0 0.0
    %195 = vmatprep.subr.mxu0 0.0
    %196 = vmatpush1.msra.mxu0 0.0
    %197 = vmatprep.subr.mxu0 0.0
    %198 = vmatpush1.msra.mxu0 0.0
    %199 = vmatprep.subr.mxu0 0.0
    %200 = vmatpush1.msra.mxu0 0.0
    %201 = vmatprep.mubr.f32.mxu0 0.0
    %202 = vmatmul.mubr.f32.gmra.mrb[0].mxu0 %v135
    %v203 = vpop.f32.mrb[0].mxu0
    %v204 = vadd.f32 %v132, %v203
    %v205 = vpop.f32.mrb[0].mxu0
    %206 = vdwg.mxu0
    %v207 = vmax.f32 %v204, 0.0
    %v208 = vld [vmem:[%s5] sm:$0x1]
    %v210 = vlaneseq
    %v211 = vshrl.u32 %v210, 7
    %v212 = vsub.s32 0, %v211
    %v213 = vrot.slane %v208, %v212
    %v215 = vmul.f32 %v207, %v213
    %vm216 = vcmask 130048
    %v217 = vsel %vm216, %v215, 0.0
    %218 = vadd.xlane.f32.xlu0 %v217
    %v219 = vpop.xlane.xlu0 %218
    %v220 = vld [vmem:[#allocation2] sm:$0x1]
    %v222 = vlaneseq
    %v223 = vshrl.u32 %v222, 7
    %v224 = vsub.s32 0, %v223
    %v225 = vrot.slane %v220, %v224
    %v227 = vadd.f32 %v219, %v225
    %v228 = vxor.u32 %v227, 2147483648
    %v229 = vmul.f32 %v228, 1.442695
    %v230 = vpow.pop %v229
    %v231 = vadd.f32 %v230, 1.0
    %v232 = vrcp.pop %v231
    %v233 = vmul.f32 1.0, %v232
    %vm234 = vcmask 7168
    %235 = vst.msk [vmem:[#allocation3] sm:$0xff] %vm234, %v233
    // Predicated region
    $region30: #{tpu_custom_call.1} parent=1 // pred_check
      _
    $region31: #{tpu_custom_call.1} parent=1 // pred_check_branch
      %237 = sbr.rel (0) target = $region33
    $region32: #{tpu_custom_call.1} parent=1 // pred_region
      // Predicated region
      $region34: #{tpu_custom_call.1} parent=32 // pred_check
        _
      $region35: #{tpu_custom_call.1} parent=32 // pred_check_branch
        %239 = sbr.rel (0) target = $region37
      $region36: #{tpu_custom_call.1} parent=32 // pred_region
        // Predicated region
        $region38: #{tpu_custom_call.1} parent=36 // pred_check
          _
        $region39: #{tpu_custom_call.1} parent=36 // pred_check_branch
          %241 = sbr.rel target = $region41
        $region40: #{tpu_custom_call.1} parent=36 // pred_region
          // Predicated region
          $region53: #{tpu_custom_call.1} parent=40 // pred_check
            _
          $region54: #{tpu_custom_call.1} parent=40 // pred_check_branch
            %256 = sbr.rel (0) target = $region56
          $region55: #{tpu_custom_call.1} parent=40 // pred_region
            loop: start=0, step=1, limit=1
            $region57: #{tpu_custom_call.1} parent=55 // loop_pre_header
              _
            $region58: #{tpu_custom_call.1} parent=55 // loop_header
              %s259 = sphi 0, %s263
              %p260 = scmp.ge.s32.totalorder %s259, 1
              %s264 = sphi [#allocation3], [#allocation3]
              %s265 = sphi %s7, %s7
            $region59: #{tpu_custom_call.1} parent=55 // loop_header_branch
              %262 = sbr.rel (%p260) target = $region63
            $region60: #{tpu_custom_call.1} parent=55 // loop_body
              %v266 = vld [vmem:[%s264] sm:$0x3]
              %267 = vst [vmem:[%s265] sm:$0x3] %v266
            $region61: #{tpu_custom_call.1} parent=55 // loop_footer
              %s263 = sadd.s32 1, %s259
            $region62: #{tpu_custom_call.1} parent=55 // loop_footer_branch
              %258 = sbr.rel target = $region58
            $region63: #{tpu_custom_call.1} parent=55 // loop_exit
              _
          $region56: #{tpu_custom_call.1} parent=40 // pred_fallthru
            _
        $region41: #{tpu_custom_call.1} parent=36 // pred_fallthru
          _
        // Predicated region
        $region42: #{tpu_custom_call.1} parent=36 // pred_check
          _
        $region43: #{tpu_custom_call.1} parent=36 // pred_check_branch
          %243 = sbr.rel (0) target = $region45
        $region44: #{tpu_custom_call.1} parent=36 // pred_region
          loop: start=0, step=1, limit=1
          $region46: #{tpu_custom_call.1} parent=44 // loop_pre_header
            _
          $region47: #{tpu_custom_call.1} parent=44 // loop_header
            %s246 = sphi 0, %s250
            %p247 = scmp.ge.s32.totalorder %s246, 1
            %s251 = sphi [#allocation3], [#allocation3]
            %s252 = sphi %s7, %s7
          $region48: #{tpu_custom_call.1} parent=44 // loop_header_branch
            %249 = sbr.rel (%p247) target = $region52
          $region49: #{tpu_custom_call.1} parent=44 // loop_body
            %v253 = vld [vmem:[%s251] sm:$0x3]
            %254 = vst [vmem:[%s252] sm:$0x3] %v253
          $region50: #{tpu_custom_call.1} parent=44 // loop_footer
            %s250 = sadd.s32 1, %s246
          $region51: #{tpu_custom_call.1} parent=44 // loop_footer_branch
            %245 = sbr.rel target = $region47
          $region52: #{tpu_custom_call.1} parent=44 // loop_exit
            _
        $region45: #{tpu_custom_call.1} parent=36 // pred_fallthru
          _
      $region37: #{tpu_custom_call.1} parent=32 // pred_fallthru
        _
      %268 = vnop
    $region33: #{tpu_custom_call.1} parent=1 // pred_fallthru
      _
    // Predicated region
    $region64: #{tpu_custom_call.1} parent=1 // pred_check
      _
    $region65: #{tpu_custom_call.1} parent=1 // pred_check_branch
      %270 = sbr.rel (0) target = $region67
    $region66: #{tpu_custom_call.1} parent=1 // pred_region
      _
    $region67: #{tpu_custom_call.1} parent=1 // pred_fallthru
      _

</llo_original>
